<compile_context>
chip_gen: v5e
topology: v5e:2x2
jax: 0.10.0
libtpu: 0.0.40
codegen_flags: <defaults>
</compile_context>

<pallas_src>
import functools

import jax
import jax.numpy as jnp
from jax.experimental import pallas as pl
from jax.experimental.pallas import tpu as pltpu


_FUSED_MAX_BYTES = 4 << 20  # x smaller than this -> single fused kernel


# ---------------------------------------------------------------------------
# Kernels
# ---------------------------------------------------------------------------
def _bn_fused_kernel(x_ref, w_ref, b_ref, o_ref, *, eps, inv_count):
    """Whole activation resident in VMEM: stats + normalize in one kernel."""
    x = x_ref[...].astype(jnp.float32)                              # (N, C, HW)
    s = jnp.sum(jnp.sum(x, axis=0), axis=-1, keepdims=True)         # (C, 1)
    ss = jnp.sum(jnp.sum(x * x, axis=0), axis=-1, keepdims=True)    # (C, 1)
    mean = s * inv_count
    var = jnp.maximum(ss * inv_count - mean * mean, 0.0)            # biased var
    scale = w_ref[...].astype(jnp.float32) * jax.lax.rsqrt(var + eps)
    shift = b_ref[...].astype(jnp.float32) - mean * scale
    o_ref[...] = (x * scale[None, :, :] + shift[None, :, :]).astype(o_ref.dtype)


def _bn_stats_kernel(x_ref, s_ref, ss_ref, *, hw, thw):
    """Per-(batch, HW-tile) partial sum / sum-of-squares, fully parallel grid."""
    t = pl.program_id(1)
    x = x_ref[...].astype(jnp.float32)                              # (C, thw)
    if hw % thw != 0:
        # cdiv tiling: mask the lane tail of the last spatial tile.
        lane = jax.lax.broadcasted_iota(jnp.int32, x.shape, dimension=1)
        x = jnp.where(t * thw + lane < hw, x, 0.0)
    s_ref[...] = jnp.sum(x, axis=-1, keepdims=True)                 # (C, 1)
    ss_ref[...] = jnp.sum(x * x, axis=-1, keepdims=True)            # (C, 1)


def _bn_apply_kernel(x_ref, scale_ref, shift_ref, o_ref):
    # x_ref: (C, thw); scale/shift: (C, 1) broadcast across lanes.
    o_ref[...] = (x_ref[...].astype(jnp.float32) * scale_ref[...]
                  + shift_ref[...]).astype(o_ref.dtype)


# ---------------------------------------------------------------------------
# Tiling / VMEM budgeting
# ---------------------------------------------------------------------------
def _chip_block_budget():
    """(per-block byte budget, scoped-VMEM limit) per chip generation."""
    block_budget, vmem_cap = 4 << 20, 48 << 20          # safe defaults
    try:
        info = pltpu.get_tpu_info()
        vmem = getattr(info, "vmem_capacity_bytes", None)
        if vmem is not None:
            if vmem <= (64 << 20):
                # v7x-class: higher HBM BW per TC -> bigger blocks to amortize
                # the ~0.35us/step overhead, but only 64 MiB physical VMEM.
                block_budget, vmem_cap = 8 << 20, 44 << 20
            else:
                # v5e / v6e: 128 MiB physical VMEM (v5e default scoped is only
                # 16 MiB -> we always pass an explicit limit below).
                block_budget, vmem_cap = 6 << 20, 48 << 20
    except Exception:
        pass
    return block_budget, vmem_cap


def _pick_hw_tile(hw, c, itemsize, block_budget_bytes):
    """Spatial (lane) tile: a multiple of 128 near the per-block byte budget
    (cdiv grid + tail mask handle any H*W), or the full extent when it fits."""
    max_lanes = (block_budget_bytes // max(1, c * itemsize)) // 128 * 128
    max_lanes = max(128, max_lanes)
    if hw <= max_lanes:
        return hw                      # full extent: always a legal block
    return max_lanes                   # multiple of 128; tail handled by mask


# ---------------------------------------------------------------------------
# Two-pass path (activation does not fit in VMEM)
# ---------------------------------------------------------------------------
def _bn_two_pass(x3, w2, b2, eps, inv_count, block_budget, vmem_cap):
    n, c, hw = x3.shape
    itemsize = x3.dtype.itemsize
    thw = _pick_hw_tile(hw, c, itemsize, block_budget)
    n_hw = pl.cdiv(hw, thw)
    block_bytes = c * thw * itemsize
    # pass 2 working set ~ 4x block (x + y, double-buffered) + slack.
    vmem_limit = int(max(32 << 20, min(vmem_cap, 4 * block_bytes + (12 << 20))))

    # ---- Pass 1: per-(batch, tile) partial stats, fully parallel grid. ----
    psum, psumsq = pl.pallas_call(
        functools.partial(_bn_stats_kernel, hw=hw, thw=thw),
        out_shape=(jax.ShapeDtypeStruct((n, n_hw, c, 1), jnp.float32),
                   jax.ShapeDtypeStruct((n, n_hw, c, 1), jnp.float32)),
        grid=(n, n_hw),
        in_specs=[pl.BlockSpec((pl.Squeezed(), c, thw), lambda i, t: (i, 0, t))],
        out_specs=(pl.BlockSpec((pl.Squeezed(), pl.Squeezed(), c, 1),
                                lambda i, t: (i, t, 0, 0)),
                   pl.BlockSpec((pl.Squeezed(), pl.Squeezed(), c, 1),
                                lambda i, t: (i, t, 0, 0))),
        compiler_params=pltpu.CompilerParams(
            dimension_semantics=("parallel", "parallel"),
            vmem_limit_bytes=vmem_limit),
    )(x3)

    # Tiny (C,)-sized combine + finalize in plain JAX (per-block partial sums
    # also improve numerics vs one long serial f32 accumulation).
    s = jnp.sum(psum, axis=(0, 1))                      # (C, 1)
    ss = jnp.sum(psumsq, axis=(0, 1))                   # (C, 1)
    mean = s * inv_count
    var = jnp.maximum(ss * inv_count - mean * mean, 0.0)
    inv_std = jax.lax.rsqrt(var + eps)
    scale = w2 * inv_std
    shift = b2 - mean * scale

    # ---- Pass 2: y = x * scale + shift (lane-dense, fully parallel). ----
    y3 = pl.pallas_call(
        _bn_apply_kernel,
        out_shape=jax.ShapeDtypeStruct((n, c, hw), x3.dtype),
        grid=(n, n_hw),
        in_specs=[pl.BlockSpec((pl.Squeezed(), c, thw), lambda i, t: (i, 0, t)),
                  pl.BlockSpec((c, 1), lambda i, t: (0, 0)),
                  pl.BlockSpec((c, 1), lambda i, t: (0, 0))],
        out_specs=pl.BlockSpec((pl.Squeezed(), c, thw), lambda i, t: (i, 0, t)),
        compiler_params=pltpu.CompilerParams(
            dimension_semantics=("parallel", "parallel"),
            vmem_limit_bytes=vmem_limit),
    )(x3, scale, shift)
    return y3


# ---------------------------------------------------------------------------
# Public entry point
# ---------------------------------------------------------------------------
def dynamic_batch_norm_2d(x, weight, bias, *, eps=1e-5, force_two_pass=False,
                          max_block_bytes=None):
    """Training-mode BatchNorm2d over NCHW input using batch statistics."""
    n, c, h, w = x.shape
    hw = h * w
    x3 = x.reshape(n, c, hw)                       # free reshape, layout kept
    w2 = weight.reshape(c, 1).astype(jnp.float32)
    b2 = bias.reshape(c, 1).astype(jnp.float32)
    inv_count = 1.0 / float(n * hw)
    eps = float(eps)

    block_budget, vmem_cap = _chip_block_budget()
    if max_block_bytes is not None:
        block_budget = int(max_block_bytes)

    x_bytes = n * c * hw * x.dtype.itemsize
    if (not force_two_pass) and x_bytes <= _FUSED_MAX_BYTES:
        # Fused single-pass: x read once, y written once (2x HBM traffic).
        y3 = pl.pallas_call(
            functools.partial(_bn_fused_kernel, eps=eps, inv_count=inv_count),
            out_shape=jax.ShapeDtypeStruct((n, c, hw), x.dtype),
            compiler_params=pltpu.CompilerParams(vmem_limit_bytes=vmem_cap),
        )(x3, w2, b2)
    else:
        y3 = _bn_two_pass(x3, w2, b2, eps, inv_count, block_budget, vmem_cap)

    return y3.reshape(n, c, h, w)


class DynamicBatchNorm2d:
    """JAX/Pallas port of DynamicBatchNorm2d (forward pass, training mode).

    Matches the non-sync path of the PyTorch module: F.batch_norm with
    training=True, i.e. normalize with batch statistics (biased variance) and
    apply the first `feature_dim` entries of the shared affine weight/bias.
    """

    def __init__(self, max_feature_dim, eps=1e-5, momentum=0.1):
        self.max_feature_dim = max_feature_dim
        self.eps = eps
        self.momentum = momentum
        # nn.BatchNorm2d init: weight=1, bias=0.
        self.weight = jnp.ones((max_feature_dim,), jnp.float32)
        self.bias = jnp.zeros((max_feature_dim,), jnp.float32)
        # Present for parity; not updated in this forward-only port.
        self.running_mean = jnp.zeros((max_feature_dim,), jnp.float32)
        self.running_var = jnp.ones((max_feature_dim,), jnp.float32)
        self.need_sync = False
        self.training = True
        # TODO(synk): bn_tracking sub-BNs are post-training stat bookkeeping
        # with no effect on the forward math; not ported.

    def forward(self, x):
        feature_dim = x.shape[1]
        if not self.training:
            raise ValueError('DynamicBN only supports training')
        if self.need_sync:
            # TODO(synk): SyncBN cross-device AllReduce (dist.all_gather) needs
            # a multi-device collective (jax.lax.psum / remote DMA); not ported.
            raise NotImplementedError('need_sync path not ported')
        w = self.weight[:feature_dim]
        b = self.bias[:feature_dim]
        # TODO(synk): in-place running_mean/var update (training side effect)
        # is skipped in this forward-only port.
        return dynamic_batch_norm_2d(x, w, b, eps=self.eps)

    __call__ = forward


if __name__ == "__main__":
    key = jax.random.PRNGKey(0)
    k_w, k_b, k_x, k_x2 = jax.random.split(key, 4)

    mod = DynamicBatchNorm2d(max_feature_dim=8)
    # Non-trivial affine params for a stronger correctness check.
    mod.weight = 1.0 + 0.1 * jax.random.normal(k_w, (8,), dtype=jnp.float32)
    mod.bias = 0.1 * jax.random.normal(k_b, (8,), dtype=jnp.float32)

    def ref_bn(x, w_full, b_full, eps):
        c = x.shape[1]
        mean = jnp.mean(x, axis=(0, 2, 3))
        var = jnp.var(x, axis=(0, 2, 3))                     # biased variance
        wv, bv = w_full[:c], b_full[:c]
        return ((x - mean[None, :, None, None])
                * jax.lax.rsqrt(var + eps)[None, :, None, None]
                * wv[None, :, None, None] + bv[None, :, None, None])

    # --- Path 1: fused single-pass (small activation, default dispatch). ---
    x = jax.random.normal(k_x, (2, 4, 16, 16), dtype=jnp.float32)  # NCHW
    y = jax.block_until_ready(mod(x))
    y_ref = ref_bn(x, mod.weight, mod.bias, mod.eps)
    assert y.shape == x.shape
    assert jnp.allclose(y, y_ref, atol=1e-4, rtol=1e-4), \
        float(jnp.max(jnp.abs(y - y_ref)))

    # --- Path 2: two-pass with cdiv tiling + lane-tail mask (forced). ---
    x2 = jax.random.normal(k_x2, (2, 4, 20, 20), dtype=jnp.float32)  # hw=400
    y2 = jax.block_until_ready(
        dynamic_batch_norm_2d(x2, mod.weight[:4], mod.bias[:4], eps=mod.eps,
                              force_two_pass=True, max_block_bytes=2048))
    y2_ref = ref_bn(x2, mod.weight, mod.bias, mod.eps)
    assert y2.shape == x2.shape
    assert jnp.allclose(y2, y2_ref, atol=1e-4, rtol=1e-4), \
        float(jnp.max(jnp.abs(y2 - y2_ref)))

    print("KERNEL_OK")
</pallas_src>

<mosaic_0001>
module attributes {stable_mosaic.version = 11 : i64} {
  func.func @_bn_fused_kernel(%arg0: memref<2x4x256xf32, #tpu.memory_space<vmem>>, %arg1: memref<4x1xf32, #tpu.memory_space<vmem>>, %arg2: memref<4x1xf32, #tpu.memory_space<vmem>>, %arg3: memref<2x4x256xf32, #tpu.memory_space<vmem>>) attributes {dimension_semantics = [], scalar_prefetch = 0 : i64, scratch_operands = 0 : i64, tpu.core_type = #tpu.core_type<tc>} {
    %c0 = arith.constant 0 : index
    %c0_0 = arith.constant 0 : index
    %c0_1 = arith.constant 0 : index
    %0 = vector.load %arg0[%c0, %c0_0, %c0_1] : memref<2x4x256xf32, #tpu.memory_space<vmem>>, vector<2x4x256xf32>
    %cst = arith.constant dense<0.000000e+00> : vector<4x256xf32>
    %1 = vector.multi_reduction <add>, %0, %cst [0] : vector<2x4x256xf32> to vector<4x256xf32>
    %cst_2 = arith.constant dense<0.000000e+00> : vector<4xf32>
    %2 = vector.multi_reduction <add>, %1, %cst_2 [1] : vector<4x256xf32> to vector<4xf32>
    %3 = vector.shape_cast %2 : vector<4xf32> to vector<4x1xf32>
    %4 = arith.mulf %0, %0 : vector<2x4x256xf32>
    %cst_3 = arith.constant dense<0.000000e+00> : vector<4x256xf32>
    %5 = vector.multi_reduction <add>, %4, %cst_3 [0] : vector<2x4x256xf32> to vector<4x256xf32>
    %cst_4 = arith.constant dense<0.000000e+00> : vector<4xf32>
    %6 = vector.multi_reduction <add>, %5, %cst_4 [1] : vector<4x256xf32> to vector<4xf32>
    %7 = vector.shape_cast %6 : vector<4xf32> to vector<4x1xf32>
    %cst_5 = arith.constant 0.001953125 : f32
    %8 = vector.broadcast %cst_5 : f32 to vector<4x1xf32>
    %9 = arith.mulf %3, %8 : vector<4x1xf32>
    %cst_6 = arith.constant 0.001953125 : f32
    %10 = vector.broadcast %cst_6 : f32 to vector<4x1xf32>
    %11 = arith.mulf %7, %10 : vector<4x1xf32>
    %12 = arith.mulf %9, %9 : vector<4x1xf32>
    %13 = arith.subf %11, %12 : vector<4x1xf32>
    %cst_7 = arith.constant 0.000000e+00 : f32
    %14 = vector.broadcast %cst_7 : f32 to vector<4x1xf32>
    %15 = arith.maximumf %13, %14 : vector<4x1xf32>
    %c0_8 = arith.constant 0 : index
    %c0_9 = arith.constant 0 : index
    %16 = vector.load %arg1[%c0_8, %c0_9] : memref<4x1xf32, #tpu.memory_space<vmem>>, vector<4x1xf32>
    %cst_10 = arith.constant 9.99999974E-6 : f32
    %17 = vector.broadcast %cst_10 : f32 to vector<4x1xf32>
    %18 = arith.addf %15, %17 : vector<4x1xf32>
    %19 = math.rsqrt %18 : vector<4x1xf32>
    %20 = arith.mulf %16, %19 : vector<4x1xf32>
    %c0_11 = arith.constant 0 : index
    %c0_12 = arith.constant 0 : index
    %21 = vector.load %arg2[%c0_11, %c0_12] : memref<4x1xf32, #tpu.memory_space<vmem>>, vector<4x1xf32>
    %22 = arith.mulf %9, %20 : vector<4x1xf32>
    %23 = arith.subf %21, %22 : vector<4x1xf32>
    %24 = vector.shape_cast %20 : vector<4x1xf32> to vector<1x4x1xf32>
    %25 = vector.broadcast %24 : vector<1x4x1xf32> to vector<2x4x256xf32>
    %26 = arith.mulf %0, %25 : vector<2x4x256xf32>
    %27 = vector.shape_cast %23 : vector<4x1xf32> to vector<1x4x1xf32>
    %28 = vector.broadcast %27 : vector<1x4x1xf32> to vector<2x4x256xf32>
    %29 = arith.addf %26, %28 : vector<2x4x256xf32>
    %c0_13 = arith.constant 0 : index
    %c0_14 = arith.constant 0 : index
    %c0_15 = arith.constant 0 : index
    %30 = vector.load %arg3[%c0_13, %c0_14, %c0_15] : memref<2x4x256xf32, #tpu.memory_space<vmem>>, vector<2x4x256xf32>
    tpu.vector_store %arg3[%c0_13, %c0_14, %c0_15], %29 {strides = array<i32>} : memref<2x4x256xf32, #tpu.memory_space<vmem>>, vector<2x4x256xf32>,
    return
  }
}

</mosaic_0001>

<llo_original>
// kernel: tpu_custom_call.1
$region0: #{tpu_custom_call.1}
  #allocation0 [shape = 'u32[]', space=smem, size = 0x4, offset = 0x4, fixed_abs, tag = 'smem constant byte address 0x4 - core index']
  #allocation1 [shape = 'u32[72,128]{1,0:T(1,128)}', space=vmem, size = 0x9000, scoped, tag = 'internal scratch']
  %s0 = inlined_call_operand.hbm [shape: f32[2,4,256], index: 0, kind: input, shape index: {}]
  %s1 = inlined_call_operand.vmem [shape: f32[4,1], index: 1, kind: input, shape index: {}]
  %s2 = inlined_call_operand.vmem [shape: f32[4,1], index: 2, kind: input, shape index: {}]
  %s3 = inlined_call_operand.hbm [shape: f32[2,4,256], index: 3, kind: output, shape index: {}]
  %s4 = sld [smem:[#allocation0]]
  $region26: #{tpu_custom_call.1} parent=0
    _
  %s6 = ssub.s32 1, %s4
  %s7 = scalar_select 0, %s6, %s4
  $region1: #{tpu_custom_call.1} parent=0
    #allocation2 [shape = 'u8[8192]{0}', space=vmem, size = 0x2000, scoped, tag = 'input window, operand 0, single buffered']
    #allocation3 [shape = 's32[1]{0}', space=sflag, size = 0x4, scoped, tag = 'scoped memory for tpu_custom_call.1']
    #allocation4 [shape = 's32[1]{0}', space=sflag, size = 0x4, scoped, tag = 'scoped memory for tpu_custom_call.1']
    #allocation5 [shape = 'u8[8192]{0}', space=vmem, size = 0x2000, scoped, tag = 'output window, operand 0, single buffered']
    %8 = vsyncpa [#allocation3], 0
    %9 = vsyncpa [#allocation4], 0
    // Predicated region
    $region2: #{tpu_custom_call.1} parent=1 // pred_check
      _
    $region3: #{tpu_custom_call.1} parent=1 // pred_check_branch
      %11 = sbr.rel (0) target = $region5
    $region4: #{tpu_custom_call.1} parent=1 // pred_region
      %13 = vsyncadd [#allocation3], 0
      %s14 = sshll.u32 %s0, 4
      %s15 = int_to_ptr.hbm [resolvable:$true] %s14
      %s16 = sshll.u32 [#allocation2], 4
      %s17 = int_to_ptr.vmem [resolvable:$true] %s16
      %22 = dma.hbm_to_vmem [thread:$0]  %s15, 256, %s17, [#allocation3], 128, 128, 8
    $region5: #{tpu_custom_call.1} parent=1 // pred_fallthru
      _
    // Predicated region
    $region6: #{tpu_custom_call.1} parent=1 // pred_check
      _
    $region7: #{tpu_custom_call.1} parent=1 // pred_check_branch
      %24 = sbr.rel (0) target = $region9
    $region8: #{tpu_custom_call.1} parent=1 // pred_region
      _
    $region9: #{tpu_custom_call.1} parent=1 // pred_fallthru
      _
    // Predicated region
    $region10: #{tpu_custom_call.1} parent=1 // pred_check
      _
    $region11: #{tpu_custom_call.1} parent=1 // pred_check_branch
      %26 = sbr.rel (0) target = $region13
    $region12: #{tpu_custom_call.1} parent=1 // pred_region
      _
    $region13: #{tpu_custom_call.1} parent=1 // pred_fallthru
      _
    // Predicated region
    $region14: #{tpu_custom_call.1} parent=1 // pred_check
      _
    $region15: #{tpu_custom_call.1} parent=1 // pred_check_branch
      %28 = sbr.rel (0) target = $region17
    $region16: #{tpu_custom_call.1} parent=1 // pred_region
      %30 = dma.done [#allocation3], 256
    $region17: #{tpu_custom_call.1} parent=1 // pred_fallthru
      _
    %v31 = vld [vmem:[#allocation2] sm:$0xff]
    %v32 = vld [vmem:[#allocation2 + $0x8] sm:$0xff]
    %35 = vst [vmem:[#allocation1] ss:$2 sm:$0xff] %v31
    %v36 = vld.sshfl [vmem:[#allocation1] sm:$0xff pattern:$0x75316420]
    %v37 = vld.sshfl [vmem:[#allocation1 + $0x8] sm:$0xff pattern:$0x75316420]
    %s38 = scalar_lea.vmem [#allocation1], 16
    %39 = vst [vmem:[%s38] ss:$2 sm:$0xff] %v32
    %v40 = vld.sshfl [vmem:[#allocation1 + $0x10] sm:$0xff pattern:$0x75316420]
    %v41 = vld.sshfl [vmem:[#allocation1 + $0x18] sm:$0xff pattern:$0x75316420]
    %vm46 = vcmask 1043456
    %v47 = vsel %vm46, %v36, 0.0
    %v48 = vsel %vm46, %v40, 0.0
    %v49 = vadd.f32 %v47, %v48
    %v50 = vsel %vm46, %v37, 0.0
    %v51 = vsel %vm46, %v41, 0.0
    %v52 = vadd.f32 %v50, %v51
    %v53 = vsel %vm46, %v49, 0.0
    %v54 = vsel %vm46, %v52, 0.0
    %v55 = vadd.f32 %v53, %v54
    %56 = vadd.xlane.f32.xlu0 %v55
    %v57 = vpop.xlane.xlu0 %56
    %v58 = vmul.f32 %v31, %v31
    %v59 = vmul.f32 %v32, %v32
    %62 = vst [vmem:[#allocation1] ss:$2 sm:$0xff] %v58
    %v63 = vld.sshfl [vmem:[#allocation1] sm:$0xff pattern:$0x75316420]
    %v64 = vld.sshfl [vmem:[#allocation1 + $0x8] sm:$0xff pattern:$0x75316420]
    %s65 = scalar_lea.vmem [#allocation1], 16
    %66 = vst [vmem:[%s65] ss:$2 sm:$0xff] %v59
    %v67 = vld.sshfl [vmem:[#allocation1 + $0x10] sm:$0xff pattern:$0x75316420]
    %v68 = vld.sshfl [vmem:[#allocation1 + $0x18] sm:$0xff pattern:$0x75316420]
    %v73 = vsel %vm46, %v63, 0.0
    %v74 = vsel %vm46, %v67, 0.0
    %v75 = vadd.f32 %v73, %v74
    %v76 = vsel %vm46, %v64, 0.0
    %v77 = vsel %vm46, %v68, 0.0
    %v78 = vadd.f32 %v76, %v77
    %v79 = vsel %vm46, %v75, 0.0
    %v80 = vsel %vm46, %v78, 0.0
    %v81 = vadd.f32 %v79, %v80
    %82 = vadd.xlane.f32.xlu0 %v81
    %v83 = vpop.xlane.xlu0 %82
    %v84 = vmul.f32 %v57, 0.001953125
    %v85 = vmul.f32 %v83, 0.001953125
    %v86 = vmul.f32 %v84, %v84
    %v87 = vsub.f32 %v85, %v86
    %v88 = vmax.f32 %v87, 0.0
    %v89 = vld [vmem:[%s1] sm:$0xf]
    %v90 = vadd.f32 %v88, 1e-05
    %v91 = vrsqrt.pop %v90
    %v92 = vmul.f32 %v91, %v90
    %v93 = vmul.f32 %v92, %v91
    %v94 = vmul.f32 0.5, %v93
    %v95 = vsub.f32 1.5, %v94
    %v96 = vmul.f32 %v91, %v95
    %vm97 = vweird.f32 %v90
    %vm98 = vweird.f32 %v91
    %vm99 = vmor %vm97, %vm98
    %v100 = vsel %vm99, %v91, %v96
    %v101 = vmul.f32 %v89, %v100
    %v102 = vld [vmem:[%s2] sm:$0xf]
    %v103 = vmul.f32 %v84, %v101
    %v104 = vsub.f32 %v102, %v103
    %106 = vset.pattern.permute.xlu0 0
    %107 = vperm.xlu0 %106, %v101
    %v108 = vpop.permute.xlu0 %107
    %v110 = vunpack.c.l.s4 839922192
    %v111 = vunpack.c.0.s8 %v110
    %v112 = vperm.slane %v108, %v111
    %v114 = vmul.f32 %v31, %v112
    %v115 = vmul.f32 %v32, %v112
    %117 = vset.pattern.permute.xlu0 0
    %118 = vperm.xlu0 %117, %v104
    %v119 = vpop.permute.xlu0 %118
    %v121 = vunpack.c.l.s4 839922192
    %v122 = vunpack.c.0.s8 %v121
    %v123 = vperm.slane %v119, %v122
    %v125 = vadd.f32 %v114, %v123
    %v126 = vadd.f32 %v115, %v123
    %127 = vst [vmem:[#allocation5] sm:$0xff] %v125
    %128 = vst [vmem:[#allocation5 + $0x8] sm:$0xff] %v126
    // Predicated region
    $region18: #{tpu_custom_call.1} parent=1 // pred_check
      _
    $region19: #{tpu_custom_call.1} parent=1 // pred_check_branch
      %130 = sbr.rel (0) target = $region21
    $region20: #{tpu_custom_call.1} parent=1 // pred_region
      %132 = vsyncadd [#allocation4], 0
      %s133 = sshll.u32 [#allocation5], 4
      %s134 = int_to_ptr.vmem [resolvable:$true] %s133
      %s135 = sshll.u32 %s3, 4
      %s136 = int_to_ptr.hbm [resolvable:$true] %s135
      %141 = dma.vmem_to_hbm [thread:$0]  %s134, 256, %s136, [#allocation4], 128, 128, 8
    $region21: #{tpu_custom_call.1} parent=1 // pred_fallthru
      _
    // Predicated region
    $region22: #{tpu_custom_call.1} parent=1 // pred_check
      _
    $region23: #{tpu_custom_call.1} parent=1 // pred_check_branch
      %143 = sbr.rel (0) target = $region25
    $region24: #{tpu_custom_call.1} parent=1 // pred_region
      %145 = dma.done [#allocation4], 256
    $region25: #{tpu_custom_call.1} parent=1 // pred_fallthru
      _
    %146 = vsyncpa [#allocation3], 1
    %147 = vsyncpa [#allocation4], 1

</llo_original>
